<compile_context>
chip_gen: v7x
topology: tpu7x:2x2x1
jax: 0.10.0
libtpu: 0.0.40
codegen_flags: <defaults>
</compile_context>

<pallas_src>
import jax
import jax.numpy as jnp
from jax.experimental import pallas as pl
from jax.experimental.pallas import tpu as pltpu


def _dqn_kernel(nc_ref, canvas_ref,
                w1_ref, b1_ref, w2_ref, b2_ref,
                w3a_ref, w3b_ref, b3_ref, w4_ref, b4_ref,
                o_ref):
    canvas = canvas_ref[...]                         # (TB, C_in)

    # fc1 + relu
    h1 = jnp.dot(canvas, w1_ref[...], preferred_element_type=jnp.float32)
    h1 = jnp.maximum(h1 + b1_ref[...], 0.0)

    # fc2 + relu
    h2 = jnp.dot(h1, w2_ref[...], preferred_element_type=jnp.float32)
    h2 = jnp.maximum(h2 + b2_ref[...], 0.0)

    # fc3 on cat([next_cell, h2]) + relu.
    # next_cell @ w3[:2] is a K=2 matmul -> do it as two VPU broadcast FMAs
    # (keeps the MXU free; padding K=2 to 128 would waste a full MXU pass).
    nc = nc_ref[...]                                 # (TB, 2)
    h3 = jnp.dot(h2, w3b_ref[...], preferred_element_type=jnp.float32)
    h3 = h3 + nc[:, 0:1] * w3a_ref[0:1, :] + nc[:, 1:2] * w3a_ref[1:2, :]
    h3 = jnp.maximum(h3 + b3_ref[...], 0.0)

    # output layer + relu (ReLU on Q-values matches the PyTorch module spec)
    out = jnp.dot(h3, w4_ref[...], preferred_element_type=jnp.float32)
    out = jnp.maximum(out + b4_ref[...], 0.0)

    o_ref[...] = out.astype(o_ref.dtype)


def dqn_forward(x, params, canvas_shape, batch_block=None):
    """x: (B, 2 + prod(canvas_shape)) float32 -> (B, *canvas_shape) float32."""
    (w1, b1, w2, b2, w3, b3, w4, b4) = params
    B = x.shape[0]
    C_in = w1.shape[0]                     # canvas numel (fc1 fan-in)
    C_out = w4.shape[1]                    # canvas numel (output fan-out)

    # Host-side split (free layout plumbing; avoids in-kernel lane shifts).
    next_cell = x[:, 0:2]
    canvas = x[:, 2:]
    w3a, w3b = w3[:2, :], w3[2:, :]        # concat-equivalent split of fc3

    # Batch tile: multiple of 8 sublanes; 256 rows for realistic batches.
    if batch_block is None:
        batch_block = 256 if B >= 256 else max(8, ((B + 7) // 8) * 8)
    tb = batch_block
    padded_B = pl.cdiv(B, tb) * tb
    if padded_B != B:
        pad = padded_B - B
        next_cell = jnp.pad(next_cell, ((0, pad), (0, 0)))
        canvas = jnp.pad(canvas, ((0, pad), (0, 0)))

    grid = (padded_B // tb,)

    def batch_spec(feat):
        return pl.BlockSpec((tb, feat), lambda i: (i, 0))

    def resident_spec(arr):
        # Whole array, same block every grid step -> stays VMEM-resident.
        return pl.BlockSpec(arr.shape, lambda i: (0, 0))

    in_specs = [
        batch_spec(2),                 # next_cell
        batch_spec(C_in),              # canvas
        resident_spec(w1), resident_spec(b1),
        resident_spec(w2), resident_spec(b2),
        resident_spec(w3a), resident_spec(w3b), resident_spec(b3),
        resident_spec(w4), resident_spec(b4),
    ]
    out_specs = batch_spec(C_out)

    out_flat = pl.pallas_call(
        _dqn_kernel,
        out_shape=jax.ShapeDtypeStruct((padded_B, C_out), jnp.float32),
        grid=grid,
        in_specs=in_specs,
        out_specs=out_specs,
        compiler_params=pltpu.CompilerParams(
            dimension_semantics=("parallel",),
            # 2x double-buffered (x + out) blocks + weights is well under this;
            # safe on every generation (v7x physical VMEM is 64 MiB).
            vmem_limit_bytes=32 * 1024 * 1024,
        ),
    )(next_cell, canvas, w1, b1, w2, b2, w3a, w3b, b3, w4, b4)

    return out_flat[:B].reshape((B, *canvas_shape))


def _init_params(key, canvas_numel, lin_features=(32, 64, 64)):
    """Deterministic init mimicking nn.Linear default (uniform +-1/sqrt(fan_in))."""
    dims = [
        (canvas_numel, lin_features[0]),                 # fc1
        (lin_features[0], lin_features[1]),              # fc2
        (lin_features[1] + 2, lin_features[2]),          # fc3 (concat input)
        (lin_features[2], canvas_numel),                 # output
    ]
    params = []
    for (fan_in, fan_out) in dims:
        key, kw, kb = jax.random.split(key, 3)
        bound = 1.0 / (fan_in ** 0.5)
        w = jax.random.uniform(kw, (fan_in, fan_out), jnp.float32, -bound, bound)
        b = jax.random.uniform(kb, (1, fan_out), jnp.float32, -bound, bound)
        params += [w, b]
    return tuple(params)


def _reference_forward(x, params, canvas_shape):
    (w1, b1, w2, b2, w3, b3, w4, b4) = params
    next_cell, canvas = x[:, 0:2], x[:, 2:]
    h1 = jax.nn.relu(canvas @ w1 + b1)
    h2 = jax.nn.relu(h1 @ w2 + b2)
    t = jnp.concatenate([next_cell, h2], axis=1)
    h3 = jax.nn.relu(t @ w3 + b3)
    out = jax.nn.relu(h3 @ w4 + b4)
    return out.reshape((-1, *canvas_shape))


if __name__ == "__main__":
    key = jax.random.PRNGKey(0)
    canvas_shape = (4, 4)                 # action_space.shape
    canvas_numel = canvas_shape[0] * canvas_shape[1]
    B = 2

    kx, kp = jax.random.split(key)
    x = jax.random.normal(kx, (B, 2 + canvas_numel), jnp.float32)
    params = _init_params(kp, canvas_numel)

    out = dqn_forward(x, params, canvas_shape)
    out = jax.block_until_ready(out)

    ref = _reference_forward(x, params, canvas_shape)
    assert out.shape == (B, *canvas_shape)
    assert jnp.allclose(out, ref, atol=1e-5, rtol=1e-5)

    print("KERNEL_OK")
</pallas_src>

<mosaic_0001>
module attributes {stable_mosaic.version = 11 : i64} {
  func.func @_dqn_kernel(%arg0: i32, %arg1: memref<8x2xf32, #tpu.memory_space<vmem>>, %arg2: memref<8x16xf32, #tpu.memory_space<vmem>>, %arg3: memref<16x32xf32, #tpu.memory_space<vmem>>, %arg4: memref<1x32xf32, #tpu.memory_space<vmem>>, %arg5: memref<32x64xf32, #tpu.memory_space<vmem>>, %arg6: memref<1x64xf32, #tpu.memory_space<vmem>>, %arg7: memref<2x64xf32, #tpu.memory_space<vmem>>, %arg8: memref<64x64xf32, #tpu.memory_space<vmem>>, %arg9: memref<1x64xf32, #tpu.memory_space<vmem>>, %arg10: memref<64x16xf32, #tpu.memory_space<vmem>>, %arg11: memref<1x16xf32, #tpu.memory_space<vmem>>, %arg12: memref<8x16xf32, #tpu.memory_space<vmem>>) attributes {dimension_semantics = [#tpu.dimension_semantics<parallel>], iteration_bounds = array<i64: 1>, scalar_prefetch = 0 : i64, scratch_operands = 0 : i64, tpu.core_type = #tpu.core_type<tc>, window_params = [{transform_indices = @transform_0, window_bounds = array<i64: 8, 2>}, {transform_indices = @transform_1, window_bounds = array<i64: 8, 16>}, {pipeline_mode = #tpu.pipeline_mode<synchronous>, transform_indices = @transform_2, window_bounds = array<i64: 16, 32>}, {pipeline_mode = #tpu.pipeline_mode<synchronous>, transform_indices = @transform_3, window_bounds = array<i64: 1, 32>}, {pipeline_mode = #tpu.pipeline_mode<synchronous>, transform_indices = @transform_4, window_bounds = array<i64: 32, 64>}, {pipeline_mode = #tpu.pipeline_mode<synchronous>, transform_indices = @transform_5, window_bounds = array<i64: 1, 64>}, {pipeline_mode = #tpu.pipeline_mode<synchronous>, transform_indices = @transform_6, window_bounds = array<i64: 2, 64>}, {pipeline_mode = #tpu.pipeline_mode<synchronous>, transform_indices = @transform_7, window_bounds = array<i64: 64, 64>}, {pipeline_mode = #tpu.pipeline_mode<synchronous>, transform_indices = @transform_8, window_bounds = array<i64: 1, 64>}, {pipeline_mode = #tpu.pipeline_mode<synchronous>, transform_indices = @transform_9, window_bounds = array<i64: 64, 16>}, {pipeline_mode = #tpu.pipeline_mode<synchronous>, transform_indices = @transform_10, window_bounds = array<i64: 1, 16>}, {transform_indices = @transform_11, window_bounds = array<i64: 8, 16>}]} {
    %c0 = arith.constant 0 : index
    %c0_0 = arith.constant 0 : index
    %0 = vector.load %arg2[%c0, %c0_0] : memref<8x16xf32, #tpu.memory_space<vmem>>, vector<8x16xf32>
    %c0_1 = arith.constant 0 : index
    %c0_2 = arith.constant 0 : index
    %1 = vector.load %arg3[%c0_1, %c0_2] : memref<16x32xf32, #tpu.memory_space<vmem>>, vector<16x32xf32>
    %cst = arith.constant dense<0.000000e+00> : vector<8x32xf32>
    %2 = tpu.matmul %0, %1, %cst {dimension_numbers = #tpu.dot_dimension_numbers<[1], [0], [0], [1], [0, 0, 1, 1], [], []>} : vector<8x16xf32>, vector<16x32xf32>, vector<8x32xf32> -> vector<8x32xf32>
    %c0_3 = arith.constant 0 : index
    %c0_4 = arith.constant 0 : index
    %3 = vector.load %arg4[%c0_3, %c0_4] : memref<1x32xf32, #tpu.memory_space<vmem>>, vector<1x32xf32>
    %4 = vector.broadcast %3 : vector<1x32xf32> to vector<8x32xf32>
    %5 = arith.addf %2, %4 : vector<8x32xf32>
    %cst_5 = arith.constant 0.000000e+00 : f32
    %6 = vector.broadcast %cst_5 : f32 to vector<8x32xf32>
    %7 = arith.maximumf %5, %6 : vector<8x32xf32>
    %c0_6 = arith.constant 0 : index
    %c0_7 = arith.constant 0 : index
    %8 = vector.load %arg5[%c0_6, %c0_7] : memref<32x64xf32, #tpu.memory_space<vmem>>, vector<32x64xf32>
    %cst_8 = arith.constant dense<0.000000e+00> : vector<8x64xf32>
    %9 = tpu.matmul %7, %8, %cst_8 {dimension_numbers = #tpu.dot_dimension_numbers<[1], [0], [0], [1], [0, 0, 1, 1], [], []>} : vector<8x32xf32>, vector<32x64xf32>, vector<8x64xf32> -> vector<8x64xf32>
    %c0_9 = arith.constant 0 : index
    %c0_10 = arith.constant 0 : index
    %10 = vector.load %arg6[%c0_9, %c0_10] : memref<1x64xf32, #tpu.memory_space<vmem>>, vector<1x64xf32>
    %11 = vector.broadcast %10 : vector<1x64xf32> to vector<8x64xf32>
    %12 = arith.addf %9, %11 : vector<8x64xf32>
    %cst_11 = arith.constant 0.000000e+00 : f32
    %13 = vector.broadcast %cst_11 : f32 to vector<8x64xf32>
    %14 = arith.maximumf %12, %13 : vector<8x64xf32>
    %c0_12 = arith.constant 0 : index
    %c0_13 = arith.constant 0 : index
    %15 = vector.load %arg1[%c0_12, %c0_13] : memref<8x2xf32, #tpu.memory_space<vmem>>, vector<8x2xf32>
    %c0_14 = arith.constant 0 : index
    %c0_15 = arith.constant 0 : index
    %16 = vector.load %arg8[%c0_14, %c0_15] : memref<64x64xf32, #tpu.memory_space<vmem>>, vector<64x64xf32>
    %cst_16 = arith.constant dense<0.000000e+00> : vector<8x64xf32>
    %17 = tpu.matmul %14, %16, %cst_16 {dimension_numbers = #tpu.dot_dimension_numbers<[1], [0], [0], [1], [0, 0, 1, 1], [], []>} : vector<8x64xf32>, vector<64x64xf32>, vector<8x64xf32> -> vector<8x64xf32>
    %18 = vector.extract_strided_slice %15 {offsets = [0, 0], sizes = [8, 1], strides = [1, 1]} : vector<8x2xf32> to vector<8x1xf32>
    %c0_17 = arith.constant 0 : index
    %c0_18 = arith.constant 0 : index
    %19 = vector.load %arg7[%c0_17, %c0_18] : memref<2x64xf32, #tpu.memory_space<vmem>>, vector<1x64xf32>
    %20 = vector.broadcast %18 : vector<8x1xf32> to vector<8x64xf32>
    %21 = vector.broadcast %19 : vector<1x64xf32> to vector<8x64xf32>
    %22 = arith.mulf %20, %21 : vector<8x64xf32>
    %23 = arith.addf %17, %22 : vector<8x64xf32>
    %24 = vector.extract_strided_slice %15 {offsets = [0, 1], sizes = [8, 1], strides = [1, 1]} : vector<8x2xf32> to vector<8x1xf32>
    %c1 = arith.constant 1 : index
    %c0_19 = arith.constant 0 : index
    %25 = vector.load %arg7[%c1, %c0_19] : memref<2x64xf32, #tpu.memory_space<vmem>>, vector<1x64xf32>
    %26 = vector.broadcast %24 : vector<8x1xf32> to vector<8x64xf32>
    %27 = vector.broadcast %25 : vector<1x64xf32> to vector<8x64xf32>
    %28 = arith.mulf %26, %27 : vector<8x64xf32>
    %29 = arith.addf %23, %28 : vector<8x64xf32>
    %c0_20 = arith.constant 0 : index
    %c0_21 = arith.constant 0 : index
    %30 = vector.load %arg9[%c0_20, %c0_21] : memref<1x64xf32, #tpu.memory_space<vmem>>, vector<1x64xf32>
    %31 = vector.broadcast %30 : vector<1x64xf32> to vector<8x64xf32>
    %32 = arith.addf %29, %31 : vector<8x64xf32>
    %cst_22 = arith.constant 0.000000e+00 : f32
    %33 = vector.broadcast %cst_22 : f32 to vector<8x64xf32>
    %34 = arith.maximumf %32, %33 : vector<8x64xf32>
    %c0_23 = arith.constant 0 : index
    %c0_24 = arith.constant 0 : index
    %35 = vector.load %arg10[%c0_23, %c0_24] : memref<64x16xf32, #tpu.memory_space<vmem>>, vector<64x16xf32>
    %cst_25 = arith.constant dense<0.000000e+00> : vector<8x16xf32>
    %36 = tpu.matmul %34, %35, %cst_25 {dimension_numbers = #tpu.dot_dimension_numbers<[1], [0], [0], [1], [0, 0, 1, 1], [], []>} : vector<8x64xf32>, vector<64x16xf32>, vector<8x16xf32> -> vector<8x16xf32>
    %c0_26 = arith.constant 0 : index
    %c0_27 = arith.constant 0 : index
    %37 = vector.load %arg11[%c0_26, %c0_27] : memref<1x16xf32, #tpu.memory_space<vmem>>, vector<1x16xf32>
    %38 = vector.broadcast %37 : vector<1x16xf32> to vector<8x16xf32>
    %39 = arith.addf %36, %38 : vector<8x16xf32>
    %cst_28 = arith.constant 0.000000e+00 : f32
    %40 = vector.broadcast %cst_28 : f32 to vector<8x16xf32>
    %41 = arith.maximumf %39, %40 : vector<8x16xf32>
    %c0_29 = arith.constant 0 : index
    %c0_30 = arith.constant 0 : index
    %42 = vector.load %arg12[%c0_29, %c0_30] : memref<8x16xf32, #tpu.memory_space<vmem>>, vector<8x16xf32>
    tpu.vector_store %arg12[%c0_29, %c0_30], %41 {strides = array<i32>} : memref<8x16xf32, #tpu.memory_space<vmem>>, vector<8x16xf32>,
    return
  }
  func.func @transform_0(%arg0: i32) -> (i32, i32) {
    %c0_i32 = arith.constant 0 : i32
    %c0_i32_0 = arith.constant 0 : i32
    return %arg0, %c0_i32 : i32, i32
  }
  func.func @transform_1(%arg0: i32) -> (i32, i32) {
    %c0_i32 = arith.constant 0 : i32
    %c0_i32_0 = arith.constant 0 : i32
    return %arg0, %c0_i32 : i32, i32
  }
  func.func @transform_2(%arg0: i32) -> (i32, i32) {
    %c0_i32 = arith.constant 0 : i32
    %c0_i32_0 = arith.constant 0 : i32
    %c0_i32_1 = arith.constant 0 : i32
    return %c0_i32, %c0_i32_0 : i32, i32
  }
  func.func @transform_3(%arg0: i32) -> (i32, i32) {
    %c0_i32 = arith.constant 0 : i32
    %c0_i32_0 = arith.constant 0 : i32
    %c0_i32_1 = arith.constant 0 : i32
    return %c0_i32, %c0_i32_0 : i32, i32
  }
  func.func @transform_4(%arg0: i32) -> (i32, i32) {
    %c0_i32 = arith.constant 0 : i32
    %c0_i32_0 = arith.constant 0 : i32
    %c0_i32_1 = arith.constant 0 : i32
    return %c0_i32, %c0_i32_0 : i32, i32
  }
  func.func @transform_5(%arg0: i32) -> (i32, i32) {
    %c0_i32 = arith.constant 0 : i32
    %c0_i32_0 = arith.constant 0 : i32
    %c0_i32_1 = arith.constant 0 : i32
    return %c0_i32, %c0_i32_0 : i32, i32
  }
  func.func @transform_6(%arg0: i32) -> (i32, i32) {
    %c0_i32 = arith.constant 0 : i32
    %c0_i32_0 = arith.constant 0 : i32
    %c0_i32_1 = arith.constant 0 : i32
    return %c0_i32, %c0_i32_0 : i32, i32
  }
  func.func @transform_7(%arg0: i32) -> (i32, i32) {
    %c0_i32 = arith.constant 0 : i32
    %c0_i32_0 = arith.constant 0 : i32
    %c0_i32_1 = arith.constant 0 : i32
    return %c0_i32, %c0_i32_0 : i32, i32
  }
  func.func @transform_8(%arg0: i32) -> (i32, i32) {
    %c0_i32 = arith.constant 0 : i32
    %c0_i32_0 = arith.constant 0 : i32
    %c0_i32_1 = arith.constant 0 : i32
    return %c0_i32, %c0_i32_0 : i32, i32
  }
  func.func @transform_9(%arg0: i32) -> (i32, i32) {
    %c0_i32 = arith.constant 0 : i32
    %c0_i32_0 = arith.constant 0 : i32
    %c0_i32_1 = arith.constant 0 : i32
    return %c0_i32, %c0_i32_0 : i32, i32
  }
  func.func @transform_10(%arg0: i32) -> (i32, i32) {
    %c0_i32 = arith.constant 0 : i32
    %c0_i32_0 = arith.constant 0 : i32
    %c0_i32_1 = arith.constant 0 : i32
    return %c0_i32, %c0_i32_0 : i32, i32
  }
  func.func @transform_11(%arg0: i32) -> (i32, i32) {
    %c0_i32 = arith.constant 0 : i32
    %c0_i32_0 = arith.constant 0 : i32
    return %arg0, %c0_i32 : i32, i32
  }
}

</mosaic_0001>

<llo_original>
// kernel: tpu_custom_call.1
$region0: #{tpu_custom_call.1}
  #allocation0 [shape = 'u32[]', space=smem, size = 0x4, offset = 0x4, fixed_abs, tag = 'smem constant byte address 0x4 - core index']
  #allocation1 [shape = 'u32[144,128]{1,0:T(1,128)}', space=vmem, size = 0x12000, scoped, tag = 'internal scratch']
  %s0 = inlined_call_operand.vmem [shape: f32[8,2], index: 0, kind: input, shape index: {}]
  %s1 = inlined_call_operand.vmem [shape: f32[8,16], index: 1, kind: input, shape index: {}]
  %s2 = inlined_call_operand.hbm [shape: f32[16,32], index: 2, kind: input, shape index: {}]
  %s3 = inlined_call_operand.hbm [shape: f32[1,32], index: 3, kind: input, shape index: {}]
  %s4 = inlined_call_operand.vmem [shape: f32[32,64], index: 4, kind: input, shape index: {}]
  %s5 = inlined_call_operand.hbm [shape: f32[1,64], index: 5, kind: input, shape index: {}]
  %s6 = inlined_call_operand.hbm [shape: f32[2,64], index: 6, kind: input, shape index: {}]
  %s7 = inlined_call_operand.vmem [shape: f32[64,64], index: 7, kind: input, shape index: {}]
  %s8 = inlined_call_operand.hbm [shape: f32[1,64], index: 8, kind: input, shape index: {}]
  %s9 = inlined_call_operand.vmem [shape: f32[64,16], index: 9, kind: input, shape index: {}]
  %s10 = inlined_call_operand.vmem [shape: f32[1,16], index: 10, kind: input, shape index: {}]
  %s11 = inlined_call_operand.hbm [shape: f32[8,16], index: 11, kind: output, shape index: {}]
  %s12 = sld [smem:[#allocation0]]
  $region74: #{tpu_custom_call.1} parent=0
    _
  %s14 = ssub.s32 1, %s12
  %s15 = scalar_select 0, %s14, %s12
  $region1: #{tpu_custom_call.1} parent=0
    #allocation2 [shape = 'u8[8192]{0}', space=vmem, size = 0x2000, scoped, tag = 'input window, operand 2, single buffered']
    #allocation3 [shape = 's32[1]{0}', space=sflag, size = 0x4, scoped, tag = 'scoped memory for tpu_custom_call.1']
    #allocation4 [shape = 's32[1]{0}', space=sflag, size = 0x4, scoped, tag = 'scoped memory for tpu_custom_call.1']
    #allocation5 [shape = 'u8[512]{0}', space=vmem, size = 0x400, scoped, tag = 'input window, operand 3, single buffered']
    #allocation6 [shape = 's32[1]{0}', space=sflag, size = 0x4, scoped, tag = 'scoped memory for tpu_custom_call.1']
    #allocation7 [shape = 'u8[512]{0}', space=vmem, size = 0x400, scoped, tag = 'input window, operand 5, single buffered']
    #allocation8 [shape = 'u8[1024]{0}', space=vmem, size = 0x400, scoped, tag = 'input window, operand 6, single buffered']
    #allocation9 [shape = 's32[1]{0}', space=sflag, size = 0x4, scoped, tag = 'scoped memory for tpu_custom_call.1']
    #allocation10 [shape = 'u8[512]{0}', space=vmem, size = 0x400, scoped, tag = 'input window, operand 8, single buffered']
    #allocation11 [shape = 'u8[4096]{0}', space=vmem, size = 0x1000, scoped, tag = 'output window, operand 0, single buffered']
    %16 = vsyncpa [#allocation3], 0
    %17 = vsyncpa [#allocation6], 0
    %18 = vsyncpa [#allocation9], 0
    %19 = vsyncpa [#allocation4], 0
    // Predicated region
    $region2: #{tpu_custom_call.1} parent=1 // pred_check
      _
    $region3: #{tpu_custom_call.1} parent=1 // pred_check_branch
      %21 = sbr.rel (0) target = $region5
    $region4: #{tpu_custom_call.1} parent=1 // pred_region
      _
    $region5: #{tpu_custom_call.1} parent=1 // pred_fallthru
      _
    // Predicated region
    $region6: #{tpu_custom_call.1} parent=1 // pred_check
      _
    $region7: #{tpu_custom_call.1} parent=1 // pred_check_branch
      %23 = sbr.rel (0) target = $region9
    $region8: #{tpu_custom_call.1} parent=1 // pred_region
      _
    $region9: #{tpu_custom_call.1} parent=1 // pred_fallthru
      _
    // Predicated region
    $region10: #{tpu_custom_call.1} parent=1 // pred_check
      _
    $region11: #{tpu_custom_call.1} parent=1 // pred_check_branch
      %25 = sbr.rel (0) target = $region13
    $region12: #{tpu_custom_call.1} parent=1 // pred_region
      %s27 = ssub.s32 256, 256
      %28 = vsyncadd [#allocation3], %s27
      %s29 = sshll.u32 [#allocation2], 4
      %s30 = int_to_ptr.vmem [resolvable:$true] %s29
      %35 = dma.hbm_to_vmem [thread:$0]  %s2, 256, %s30, [#allocation3], 128, 128, 8
    $region13: #{tpu_custom_call.1} parent=1 // pred_fallthru
      _
    // Predicated region
    $region14: #{tpu_custom_call.1} parent=1 // pred_check
      _
    $region15: #{tpu_custom_call.1} parent=1 // pred_check_branch
      %37 = sbr.rel (0) target = $region17
    $region16: #{tpu_custom_call.1} parent=1 // pred_region
      %s39 = ssub.s32 16, 16
      %40 = vsyncadd [#allocation6], %s39
      %s42 = sshll.u32 [#allocation5], 4
      %s43 = int_to_ptr.vmem [resolvable:$true] %s42
      %45 = dma.hbm_to_vmem [thread:$0]  %s3, 16, %s43, [#allocation6]
    $region17: #{tpu_custom_call.1} parent=1 // pred_fallthru
      _
    // Predicated region
    $region18: #{tpu_custom_call.1} parent=1 // pred_check
      _
    $region19: #{tpu_custom_call.1} parent=1 // pred_check_branch
      %47 = sbr.rel (0) target = $region21
    $region20: #{tpu_custom_call.1} parent=1 // pred_region
      _
    $region21: #{tpu_custom_call.1} parent=1 // pred_fallthru
      _
    // Predicated region
    $region22: #{tpu_custom_call.1} parent=1 // pred_check
      _
    $region23: #{tpu_custom_call.1} parent=1 // pred_check_branch
      %49 = sbr.rel (0) target = $region25
    $region24: #{tpu_custom_call.1} parent=1 // pred_region
      %s51 = ssub.s32 16, 16
      %52 = vsyncadd [#allocation6], %s51
      %s54 = sshll.u32 [#allocation7], 4
      %s55 = int_to_ptr.vmem [resolvable:$true] %s54
      %57 = dma.hbm_to_vmem [thread:$0]  %s5, 16, %s55, [#allocation6]
    $region25: #{tpu_custom_call.1} parent=1 // pred_fallthru
      _
    // Predicated region
    $region26: #{tpu_custom_call.1} parent=1 // pred_check
      _
    $region27: #{tpu_custom_call.1} parent=1 // pred_check_branch
      %59 = sbr.rel (0) target = $region29
    $region28: #{tpu_custom_call.1} parent=1 // pred_region
      %s61 = ssub.s32 32, 32
      %62 = vsyncadd [#allocation9], %s61
      %s64 = sshll.u32 [#allocation8], 4
      %s65 = int_to_ptr.vmem [resolvable:$true] %s64
      %67 = dma.hbm_to_vmem [thread:$0]  %s6, 32, %s65, [#allocation9]
    $region29: #{tpu_custom_call.1} parent=1 // pred_fallthru
      _
    // Predicated region
    $region30: #{tpu_custom_call.1} parent=1 // pred_check
      _
    $region31: #{tpu_custom_call.1} parent=1 // pred_check_branch
      %69 = sbr.rel (0) target = $region33
    $region32: #{tpu_custom_call.1} parent=1 // pred_region
      _
    $region33: #{tpu_custom_call.1} parent=1 // pred_fallthru
      _
    // Predicated region
    $region34: #{tpu_custom_call.1} parent=1 // pred_check
      _
    $region35: #{tpu_custom_call.1} parent=1 // pred_check_branch
      %71 = sbr.rel (0) target = $region37
    $region36: #{tpu_custom_call.1} parent=1 // pred_region
      %s73 = ssub.s32 16, 16
      %74 = vsyncadd [#allocation9], %s73
      %s76 = sshll.u32 [#allocation10], 4
      %s77 = int_to_ptr.vmem [resolvable:$true] %s76
      %79 = dma.hbm_to_vmem [thread:$0]  %s8, 16, %s77, [#allocation9]
    $region37: #{tpu_custom_call.1} parent=1 // pred_fallthru
      _
    // Predicated region
    $region38: #{tpu_custom_call.1} parent=1 // pred_check
      _
    $region39: #{tpu_custom_call.1} parent=1 // pred_check_branch
      %81 = sbr.rel (0) target = $region41
    $region40: #{tpu_custom_call.1} parent=1 // pred_region
      _
    $region41: #{tpu_custom_call.1} parent=1 // pred_fallthru
      _
    // Predicated region
    $region42: #{tpu_custom_call.1} parent=1 // pred_check
      _
    $region43: #{tpu_custom_call.1} parent=1 // pred_check_branch
      %83 = sbr.rel (0) target = $region45
    $region44: #{tpu_custom_call.1} parent=1 // pred_region
      _
    $region45: #{tpu_custom_call.1} parent=1 // pred_fallthru
      _
    // Predicated region
    $region46: #{tpu_custom_call.1} parent=1 // pred_check
      _
    $region47: #{tpu_custom_call.1} parent=1 // pred_check_branch
      %85 = sbr.rel (0) target = $region49
    $region48: #{tpu_custom_call.1} parent=1 // pred_region
      %86 = dma.done [#allocation3], 256
    $region49: #{tpu_custom_call.1} parent=1 // pred_fallthru
      _
    // Predicated region
    $region50: #{tpu_custom_call.1} parent=1 // pred_check
      _
    $region51: #{tpu_custom_call.1} parent=1 // pred_check_branch
      %88 = sbr.rel (0) target = $region53
    $region52: #{tpu_custom_call.1} parent=1 // pred_region
      %89 = dma.done [#allocation6], 16
    $region53: #{tpu_custom_call.1} parent=1 // pred_fallthru
      _
    // Predicated region
    $region54: #{tpu_custom_call.1} parent=1 // pred_check
      _
    $region55: #{tpu_custom_call.1} parent=1 // pred_check_branch
      %91 = sbr.rel (0) target = $region57
    $region56: #{tpu_custom_call.1} parent=1 // pred_region
      %92 = dma.done [#allocation6], 16
    $region57: #{tpu_custom_call.1} parent=1 // pred_fallthru
      _
    // Predicated region
    $region58: #{tpu_custom_call.1} parent=1 // pred_check
      _
    $region59: #{tpu_custom_call.1} parent=1 // pred_check_branch
      %94 = sbr.rel (0) target = $region61
    $region60: #{tpu_custom_call.1} parent=1 // pred_region
      %95 = dma.done [#allocation9], 32
    $region61: #{tpu_custom_call.1} parent=1 // pred_fallthru
      _
    // Predicated region
    $region62: #{tpu_custom_call.1} parent=1 // pred_check
      _
    $region63: #{tpu_custom_call.1} parent=1 // pred_check_branch
      %97 = sbr.rel (0) target = $region65
    $region64: #{tpu_custom_call.1} parent=1 // pred_region
      %98 = dma.done [#allocation9], 16
    $region65: #{tpu_custom_call.1} parent=1 // pred_fallthru
      _
    %v99 = vld [vmem:[%s1] sm:$0xff]
    %v100 = vld [vmem:[#allocation2] sm:$0xff]
    %v101 = vld [vmem:[#allocation2 + $0x8] sm:$0xff]
    %v102 = vld [vmem:[#allocation5] sm:$0x1]
    %v104 = vlaneseq
    %v105 = vshrl.u32 %v104, 7
    %v106 = vsub.s32 0, %v105
    %v107 = vrot.slane %v102, %v106
    %vm109 = vcmask 130048
    %v111 = vsel %vm109, %v99, 0
    %113 = vmatprep.subr.mxu0 0.0
    %114 = vmatpush1.msra.mxu0 %v100
    %115 = vmatprep.subr.mxu0 0.0
    %116 = vmatpush1.msra.mxu0 %v101
    %117 = vmatprep.subr.mxu0 0.0
    %118 = vmatpush1.msra.mxu0 0.0
    %119 = vmatprep.subr.mxu0 0.0
    %120 = vmatpush1.msra.mxu0 0.0
    %121 = vmatprep.subr.mxu0 0.0
    %122 = vmatpush1.msra.mxu0 0.0
    %123 = vmatprep.subr.mxu0 0.0
    %124 = vmatpush1.msra.mxu0 0.0
    %125 = vmatprep.subr.mxu0 0.0
    %126 = vmatpush1.msra.mxu0 0.0
    %127 = vmatprep.subr.mxu0 0.0
    %128 = vmatpush1.msra.mxu0 0.0
    %129 = vmatprep.subr.mxu0 0.0
    %130 = vmatpush1.msra.mxu0 0.0
    %131 = vmatprep.subr.mxu0 0.0
    %132 = vmatpush1.msra.mxu0 0.0
    %133 = vmatprep.subr.mxu0 0.0
    %134 = vmatpush1.msra.mxu0 0.0
    %135 = vmatprep.subr.mxu0 0.0
    %136 = vmatpush1.msra.mxu0 0.0
    %137 = vmatprep.subr.mxu0 0.0
    %138 = vmatpush1.msra.mxu0 0.0
    %139 = vmatprep.subr.mxu0 0.0
    %140 = vmatpush1.msra.mxu0 0.0
    %141 = vmatprep.subr.mxu0 0.0
    %142 = vmatpush1.msra.mxu0 0.0
    %143 = vmatprep.subr.mxu0 0.0
    %144 = vmatpush1.msra.mxu0 0.0
    %145 = vmatprep.subr.mxu0 0.0
    %146 = vmatpush1.msra.mxu0 0.0
    %147 = vmatprep.subr.mxu0 0.0
    %148 = vmatpush1.msra.mxu0 0.0
    %149 = vmatprep.subr.mxu0 0.0
    %150 = vmatpush1.msra.mxu0 0.0
    %151 = vmatprep.subr.mxu0 0.0
    %152 = vmatpush1.msra.mxu0 0.0
    %153 = vmatprep.subr.mxu0 0.0
    %154 = vmatpush1.msra.mxu0 0.0
    %155 = vmatprep.subr.mxu0 0.0
    %156 = vmatpush1.msra.mxu0 0.0
    %157 = vmatprep.subr.mxu0 0.0
    %158 = vmatpush1.msra.mxu0 0.0
    %159 = vmatprep.subr.mxu0 0.0
    %160 = vmatpush1.msra.mxu0 0.0
    %161 = vmatprep.subr.mxu0 0.0
    %162 = vmatpush1.msra.mxu0 0.0
    %163 = vmatprep.subr.mxu0 0.0
    %164 = vmatpush1.msra.mxu0 0.0
    %165 = vmatprep.subr.mxu0 0.0
    %166 = vmatpush1.msra.mxu0 0.0
    %167 = vmatprep.subr.mxu0 0.0
    %168 = vmatpush1.msra.mxu0 0.0
    %169 = vmatprep.subr.mxu0 0.0
    %170 = vmatpush1.msra.mxu0 0.0
    %171 = vmatprep.subr.mxu0 0.0
    %172 = vmatpush1.msra.mxu0 0.0
    %173 = vmatprep.subr.mxu0 0.0
    %174 = vmatpush1.msra.mxu0 0.0
    %175 = vmatprep.subr.mxu0 0.0
    %176 = vmatpush1.msra.mxu0 0.0
    %177 = vmatprep.mubr.f32.mxu0 0.0
    %178 = vmatmul.mubr.f32.gmra.mrb[0].mxu0 %v111
    %v179 = vpop.f32.mrb[0].mxu0
    %v180 = vadd.f32 %v107, %v179
    %v181 = vpop.f32.mrb[0].mxu0
    %182 = vdwg.mxu0
    %v183 = vmax.f32 %v180, 0.0
    %v184 = vld [vmem:[%s4] sm:$0xff]
    %v185 = vld [vmem:[%s4 + $0x8] sm:$0xff]
    %v186 = vld [vmem:[%s4 + $0x10] sm:$0xff]
    %v187 = vld [vmem:[%s4 + $0x18] sm:$0xff]
    %v188 = vld [vmem:[#allocation7] sm:$0x1]
    %v190 = vlaneseq
    %v191 = vshrl.u32 %v190, 7
    %v192 = vsub.s32 0, %v191
    %v193 = vrot.slane %v188, %v192
    %vm195 = vcmask 261120
    %v197 = vsel %vm195, %v183, 0
    %199 = vmatprep.subr.mxu0 0.0
    %200 = vmatpush1.msra.mxu0 %v184
    %201 = vmatprep.subr.mxu0 0.0
    %202 = vmatpush1.msra.mxu0 %v185
    %203 = vmatprep.subr.mxu0 0.0
    %204 = vmatpush1.msra.mxu0 %v186
    %205 = vmatprep.subr.mxu0 0.0
    %206 = vmatpush1.msra.mxu0 %v187
    %207 = vmatprep.subr.mxu0 0.0
    %208 = vmatpush1.msra.mxu0 0.0
    %209 = vmatprep.subr.mxu0 0.0
    %210 = vmatpush1.msra.mxu0 0.0
    %211 = vmatprep.subr.mxu0 0.0
    %212 = vmatpush1.msra.mxu0 0.0
    %213 = vmatprep.subr.mxu0 0.0
    %214 = vmatpush1.msra.mxu0 0.0
    %215 = vmatprep.subr.mxu0 0.0
    %216 = vmatpush1.msra.mxu0 0.0
    %217 = vmatprep.subr.mxu0 0.0
    %218 = vmatpush1.msra.mxu0 0.0
    %219 = vmatprep.subr.mxu0 0.0
    %220 = vmatpush1.msra.mxu0 0.0
    %221 = vmatprep.subr.mxu0 0.0
    %222 = vmatpush1.msra.mxu0 0.0
    %223 = vmatprep.subr.mxu0 0.0
    %224 = vmatpush1.msra.mxu0 0.0
    %225 = vmatprep.subr.mxu0 0.0
    %226 = vmatpush1.msra.mxu0 0.0
    %227 = vmatprep.subr.mxu0 0.0
    %228 = vmatpush1.msra.mxu0 0.0
    %229 = vmatprep.subr.mxu0 0.0
    %230 = vmatpush1.msra.mxu0 0.0
    %231 = vmatprep.subr.mxu0 0.0
    %232 = vmatpush1.msra.mxu0 0.0
    %233 = vmatprep.subr.mxu0 0.0
    %234 = vmatpush1.msra.mxu0 0.0
    %235 = vmatprep.subr.mxu0 0.0
    %236 = vmatpush1.msra.mxu0 0.0
    %237 = vmatprep.subr.mxu0 0.0
    %238 = vmatpush1.msra.mxu0 0.0
    %239 = vmatprep.subr.mxu0 0.0
    %240 = vmatpush1.msra.mxu0 0.0
    %241 = vmatprep.subr.mxu0 0.0
    %242 = vmatpush1.msra.mxu0 0.0
    %243 = vmatprep.subr.mxu0 0.0
    %244 = vmatpush1.msra.mxu0 0.0
    %245 = vmatprep.subr.mxu0 0.0
    %246 = vmatpush1.msra.mxu0 0.0
    %247 = vmatprep.subr.mxu0 0.0
    %248 = vmatpush1.msra.mxu0 0.0
    %249 = vmatprep.subr.mxu0 0.0
    %250 = vmatpush1.msra.mxu0 0.0
    %251 = vmatprep.subr.mxu0 0.0
    %252 = vmatpush1.msra.mxu0 0.0
    %253 = vmatprep.subr.mxu0 0.0
    %254 = vmatpush1.msra.mxu0 0.0
    %255 = vmatprep.subr.mxu0 0.0
    %256 = vmatpush1.msra.mxu0 0.0
    %257 = vmatprep.subr.mxu0 0.0
    %258 = vmatpush1.msra.mxu0 0.0
    %259 = vmatprep.subr.mxu0 0.0
    %260 = vmatpush1.msra.mxu0 0.0
    %261 = vmatprep.subr.mxu0 0.0
    %262 = vmatpush1.msra.mxu0 0.0
    %263 = vmatprep.mubr.f32.mxu0 0.0
    %264 = vmatmul.mubr.f32.gmra.mrb[0].mxu0 %v197
    %v265 = vpop.f32.mrb[0].mxu0
    %v266 = vadd.f32 %v193, %v265
    %v267 = vpop.f32.mrb[0].mxu0
    %268 = vdwg.mxu0
    %v269 = vmax.f32 %v266, 0.0
    %v270 = vld [vmem:[%s0] sm:$0xff]
    %v271 = vld [vmem:[%s7] sm:$0xff]
    %v272 = vld [vmem:[%s7 + $0x8] sm:$0xff]
    %v273 = vld [vmem:[%s7 + $0x10] sm:$0xff]
    %v274 = vld [vmem:[%s7 + $0x18] sm:$0xff]
    %v275 = vld [vmem:[%s7 + $0x20] sm:$0xff]
    %v276 = vld [vmem:[%s7 + $0x28] sm:$0xff]
    %v277 = vld [vmem:[%s7 + $0x30] sm:$0xff]
    %v278 = vld [vmem:[%s7 + $0x38] sm:$0xff]
    %v279 = vld [vmem:[#allocation8] sm:$0x1]
    %281 = vset.pattern.permute.xlu0 0
    %282 = vperm.xlu0 %281, %v270
    %v283 = vpop.permute.xlu0 %282
    %v285 = vlaneseq
    %v286 = vshrl.u32 %v285, 7
    %v287 = vsub.s32 0, %v286
    %v288 = vrot.slane %v279, %v287
    %v289 = vmul.f32 %v283, %v288
    %vm290 = vcmask 523264
    %v292 = vsel %vm290, %v269, 0
    %294 = vmatprep.subr.mxu0 0.0
    %295 = vmatpush1.msra.mxu0 %v271
    %296 = vmatprep.subr.mxu0 0.0
    %297 = vmatpush1.msra.mxu0 %v272
    %298 = vmatprep.subr.mxu0 0.0
    %299 = vmatpush1.msra.mxu0 %v273
    %300 = vmatprep.subr.mxu0 0.0
    %301 = vmatpush1.msra.mxu0 %v274
    %302 = vmatprep.subr.mxu0 0.0
    %303 = vmatpush1.msra.mxu0 %v275
    %304 = vmatprep.subr.mxu0 0.0
    %305 = vmatpush1.msra.mxu0 %v276
    %306 = vmatprep.subr.mxu0 0.0
    %307 = vmatpush1.msra.mxu0 %v277
    %308 = vmatprep.subr.mxu0 0.0
    %309 = vmatpush1.msra.mxu0 %v278
    %310 = vmatprep.subr.mxu0 0.0
    %311 = vmatpush1.msra.mxu0 0.0
    %312 = vmatprep.subr.mxu0 0.0
    %313 = vmatpush1.msra.mxu0 0.0
    %314 = vmatprep.subr.mxu0 0.0
    %315 = vmatpush1.msra.mxu0 0.0
    %316 = vmatprep.subr.mxu0 0.0
    %317 = vmatpush1.msra.mxu0 0.0
    %318 = vmatprep.subr.mxu0 0.0
    %319 = vmatpush1.msra.mxu0 0.0
    %320 = vmatprep.subr.mxu0 0.0
    %321 = vmatpush1.msra.mxu0 0.0
    %322 = vmatprep.subr.mxu0 0.0
    %323 = vmatpush1.msra.mxu0 0.0
    %324 = vmatprep.subr.mxu0 0.0
    %325 = vmatpush1.msra.mxu0 0.0
    %326 = vmatprep.subr.mxu0 0.0
    %327 = vmatpush1.msra.mxu0 0.0
    %328 = vmatprep.subr.mxu0 0.0
    %329 = vmatpush1.msra.mxu0 0.0
    %330 = vmatprep.subr.mxu0 0.0
    %331 = vmatpush1.msra.mxu0 0.0
    %332 = vmatprep.subr.mxu0 0.0
    %333 = vmatpush1.msra.mxu0 0.0
    %334 = vmatprep.subr.mxu0 0.0
    %335 = vmatpush1.msra.mxu0 0.0
    %336 = vmatprep.subr.mxu0 0.0
    %337 = vmatpush1.msra.mxu0 0.0
    %338 = vmatprep.subr.mxu0 0.0
    %339 = vmatpush1.msra.mxu0 0.0
    %340 = vmatprep.subr.mxu0 0.0
    %341 = vmatpush1.msra.mxu0 0.0
    %342 = vmatprep.subr.mxu0 0.0
    %343 = vmatpush1.msra.mxu0 0.0
    %344 = vmatprep.subr.mxu0 0.0
    %345 = vmatpush1.msra.mxu0 0.0
    %346 = vmatprep.subr.mxu0 0.0
    %347 = vmatpush1.msra.mxu0 0.0
    %348 = vmatprep.subr.mxu0 0.0
    %349 = vmatpush1.msra.mxu0 0.0
    %350 = vmatprep.subr.mxu0 0.0
    %351 = vmatpush1.msra.mxu0 0.0
    %352 = vmatprep.subr.mxu0 0.0
    %353 = vmatpush1.msra.mxu0 0.0
    %354 = vmatprep.subr.mxu0 0.0
    %355 = vmatpush1.msra.mxu0 0.0
    %356 = vmatprep.subr.mxu0 0.0
    %357 = vmatpush1.msra.mxu0 0.0
    %358 = vmatprep.mubr.f32.mxu0 0.0
    %359 = vmatmul.mubr.f32.gmra.mrb[0].mxu0 %v292
    %v360 = vpop.f32.mrb[0].mxu0
    %v361 = vadd.f32 %v289, %v360
    %v362 = vpop.f32.mrb[0].mxu0
    %363 = vdwg.mxu0
    %v364 = vld [vmem:[#allocation8 + $0x1] sm:$0x1]
    %365 = vset.pattern.permute.xlu0 1
    %366 = vperm.xlu0 %365, %v270
    %v367 = vpop.permute.xlu0 %366
    %v369 = vlaneseq
    %v370 = vshrl.u32 %v369, 7
    %v371 = vsub.s32 0, %v370
    %v372 = vrot.slane %v364, %v371
    %v373 = vmul.f32 %v367, %v372
    %v374 = vadd.f32 %v361, %v373
    %v375 = vld [vmem:[#allocation10] sm:$0x1]
    %v377 = vlaneseq
    %v378 = vshrl.u32 %v377, 7
    %v379 = vsub.s32 0, %v378
    %v380 = vrot.slane %v375, %v379
    %v382 = vadd.f32 %v374, %v380
    %v383 = vmax.f32 %v382, 0.0
    %v384 = vld [vmem:[%s9] sm:$0xff]
    %v385 = vld [vmem:[%s9 + $0x8] sm:$0xff]
    %v386 = vld [vmem:[%s9 + $0x10] sm:$0xff]
    %v387 = vld [vmem:[%s9 + $0x18] sm:$0xff]
    %v388 = vld [vmem:[%s9 + $0x20] sm:$0xff]
    %v389 = vld [vmem:[%s9 + $0x28] sm:$0xff]
    %v390 = vld [vmem:[%s9 + $0x30] sm:$0xff]
    %v391 = vld [vmem:[%s9 + $0x38] sm:$0xff]
    %v392 = vld [vmem:[%s10] sm:$0x1]
    %v394 = vlaneseq
    %v395 = vshrl.u32 %v394, 7
    %v396 = vsub.s32 0, %v395
    %v397 = vrot.slane %v392, %v396
    %v400 = vsel %vm290, %v383, 0
    %402 = vmatprep.subr.mxu0 0.0
    %403 = vmatpush1.msra.mxu0 %v384
    %404 = vmatprep.subr.mxu0 0.0
    %405 = vmatpush1.msra.mxu0 %v385
    %406 = vmatprep.subr.mxu0 0.0
    %407 = vmatpush1.msra.mxu0 %v386
    %408 = vmatprep.subr.mxu0 0.0
    %409 = vmatpush1.msra.mxu0 %v387
    %410 = vmatprep.subr.mxu0 0.0
    %411 = vmatpush1.msra.mxu0 %v388
    %412 = vmatprep.subr.mxu0 0.0
    %413 = vmatpush1.msra.mxu0 %v389
    %414 = vmatprep.subr.mxu0 0.0
    %415 = vmatpush1.msra.mxu0 %v390
    %416 = vmatprep.subr.mxu0 0.0
    %417 = vmatpush1.msra.mxu0 %v391
    %418 = vmatprep.subr.mxu0 0.0
    %419 = vmatpush1.msra.mxu0 0.0
    %420 = vmatprep.subr.mxu0 0.0
    %421 = vmatpush1.msra.mxu0 0.0
    %422 = vmatprep.subr.mxu0 0.0
    %423 = vmatpush1.msra.mxu0 0.0
    %424 = vmatprep.subr.mxu0 0.0
    %425 = vmatpush1.msra.mxu0 0.0
    %426 = vmatprep.subr.mxu0 0.0
    %427 = vmatpush1.msra.mxu0 0.0
    %428 = vmatprep.subr.mxu0 0.0
    %429 = vmatpush1.msra.mxu0 0.0
    %430 = vmatprep.subr.mxu0 0.0
    %431 = vmatpush1.msra.mxu0 0.0
    %432 = vmatprep.subr.mxu0 0.0
    %433 = vmatpush1.msra.mxu0 0.0
    %434 = vmatprep.subr.mxu0 0.0
    %435 = vmatpush1.msra.mxu0 0.0
    %436 = vmatprep.subr.mxu0 0.0
    %437 = vmatpush1.msra.mxu0 0.0
    %438 = vmatprep.subr.mxu0 0.0
    %439 = vmatpush1.msra.mxu0 0.0
    %440 = vmatprep.subr.mxu0 0.0
    %441 = vmatpush1.msra.mxu0 0.0
    %442 = vmatprep.subr.mxu0 0.0
    %443 = vmatpush1.msra.mxu0 0.0
    %444 = vmatprep.subr.mxu0 0.0
    %445 = vmatpush1.msra.mxu0 0.0
    %446 = vmatprep.subr.mxu0 0.0
    %447 = vmatpush1.msra.mxu0 0.0
    %448 = vmatprep.subr.mxu0 0.0
    %449 = vmatpush1.msra.mxu0 0.0
    %450 = vmatprep.subr.mxu0 0.0
    %451 = vmatpush1.msra.mxu0 0.0
    %452 = vmatprep.subr.mxu0 0.0
    %453 = vmatpush1.msra.mxu0 0.0
    %454 = vmatprep.subr.mxu0 0.0
    %455 = vmatpush1.msra.mxu0 0.0
    %456 = vmatprep.subr.mxu0 0.0
    %457 = vmatpush1.msra.mxu0 0.0
    %458 = vmatprep.subr.mxu0 0.0
    %459 = vmatpush1.msra.mxu0 0.0
    %460 = vmatprep.subr.mxu0 0.0
    %461 = vmatpush1.msra.mxu0 0.0
    %462 = vmatprep.subr.mxu0 0.0
    %463 = vmatpush1.msra.mxu0 0.0
    %464 = vmatprep.subr.mxu0 0.0
    %465 = vmatpush1.msra.mxu0 0.0
    %466 = vmatprep.mubr.f32.mxu0 0.0
    %467 = vmatmul.mubr.f32.gmra.mrb[0].mxu0 %v400
    %v468 = vpop.f32.mrb[0].mxu0
    %v469 = vadd.f32 %v397, %v468
    %v470 = vpop.f32.mrb[0].mxu0
    %471 = vdwg.mxu0
    %v472 = vmax.f32 %v469, 0.0
    %473 = vst.msk [vmem:[#allocation11] sm:$0xff] %vm109, %v472
    // Predicated region
    $region66: #{tpu_custom_call.1} parent=1 // pred_check
      _
    $region67: #{tpu_custom_call.1} parent=1 // pred_check_branch
      %475 = sbr.rel (0) target = $region69
    $region68: #{tpu_custom_call.1} parent=1 // pred_region
      %s477 = ssub.s32 128, 128
      %478 = vsyncadd [#allocation4], %s477
      %s480 = sshll.u32 [#allocation11], 4
      %s481 = int_to_ptr.vmem [resolvable:$true] %s480
      %483 = dma.vmem_to_hbm [thread:$0]  %s481, 128, %s11, [#allocation4]
    $region69: #{tpu_custom_call.1} parent=1 // pred_fallthru
      _
    // Predicated region
    $region70: #{tpu_custom_call.1} parent=1 // pred_check
      _
    $region71: #{tpu_custom_call.1} parent=1 // pred_check_branch
      %485 = sbr.rel (0) target = $region73
    $region72: #{tpu_custom_call.1} parent=1 // pred_region
      %486 = dma.done [#allocation4], 128
    $region73: #{tpu_custom_call.1} parent=1 // pred_fallthru
      _
    %487 = vsyncpa [#allocation3], 1
    %488 = vsyncpa [#allocation6], 1
    %489 = vsyncpa [#allocation9], 1
    %490 = vsyncpa [#allocation4], 1

</llo_original>
